<compile_context>
chip_gen: v6e
topology: v6e:2x2x1
jax: 0.10.0
libtpu: 0.0.40
codegen_flags: <defaults>
</compile_context>

<pallas_src>
import math

import jax
import jax.numpy as jnp
from jax.experimental import pallas as pl
from jax.experimental.pallas import tpu as pltpu


# ------------------------------- small helpers ------------------------------
def _round_up(a: int, b: int) -> int:
    return ((a + b - 1) // b) * b


def _cdiv(a: int, b: int) -> int:
    return -(-a // b)


def _vmem_capacity_bytes() -> int:
    """Physical VMEM of the current chip (64 MiB on v7x, 128 MiB on v5e/v6e)."""
    try:
        info = pltpu.get_tpu_info()
        for attr in ("vmem_capacity_bytes", "vmem_size_bytes", "vmem_bytes"):
            v = getattr(info, attr, None)
            if v:
                return int(v)
    except Exception:
        pass
    return 64 * 1024 * 1024  # conservative (v7x-sized) fallback


def _sublane_pack(dtype) -> int:
    # rows per sublane tile: 8 (f32), 16 (bf16), 32 (int8/fp8)
    return max(8, 32 // jnp.dtype(dtype).itemsize)


def _pick_row_tiling(m: int, pack: int, small_vmem: bool):
    """Row tile tm and padded row count mp.

    * tm rounded to the dtype's sublane pack (never sub-tile bf16/int8 blocks).
    * default tm: 512 on 128-MiB-VMEM chips (v5e/v6e), 256 on v7x (64 MiB).
    * on small-VMEM (v7x-like) chips guarantee >=2 row tiles so the 'parallel'
      axis can shard across both TensorCores.
    """
    tm_default = 256 if small_vmem else 512
    min_tiles = 2 if small_vmem else 1
    tm = min(tm_default, _round_up(max(1, _cdiv(m, min_tiles)), pack))
    tm = max(tm, pack)
    mp = _round_up(m, tm)
    if small_vmem and mp // tm < 2:
        mp = 2 * tm
    return tm, mp


def _compiler_params(semantics, est_bytes: int, budget: int):
    # Always set the scoped-VMEM limit (v5e default is only 16 MiB) but never
    # request more than the chip physically has (64 MiB on v7x).
    limit = int(min(max(int(est_bytes * 1.5) + (8 << 20), 32 << 20), budget))
    return pltpu.CompilerParams(dimension_semantics=semantics,
                                vmem_limit_bytes=limit)


# --------------------------- fused kernels (2 paths) ------------------------
def _make_resident_kernel(n_layers, n_h, th, inv_dim, eps, cdt):
    """Whole forward for one row tile; all weights are VMEM-resident."""
    def kernel(x_ref, wi_ref, bi_ref, g_ref, w13_ref, w2t_ref, o_ref):
        # in_layer: Linear(in_dim, dim) + bias (f32 residual stream)
        y = jnp.dot(x_ref[...], wi_ref[...], preferred_element_type=jnp.float32)
        y = y + bi_ref[...].astype(jnp.float32)
        for l in range(n_layers):
            # RMSNorm: mean over the ORIGINAL dim (padded lanes are zero)
            ms = jnp.sum(y * y, axis=-1, keepdims=True) * inv_dim
            normed = (y * jax.lax.rsqrt(ms + eps)).astype(cdt) * g_ref[l].astype(cdt)
            ffn = None
            for h in range(n_h):
                hh = jnp.dot(normed, w13_ref[l * n_h + h],
                             preferred_element_type=jnp.float32)
                h1 = hh[:, :th]
                h3 = hh[:, th:]
                gate = (h1 * jax.nn.sigmoid(h1)) * h3          # SiLU gate, f32
                p = jnp.dot(gate.astype(cdt), w2t_ref[l * n_h + h],
                            preferred_element_type=jnp.float32)
                ffn = p if ffn is None else ffn + p
            y = y + ffn                                        # residual
        o_ref[...] = y.astype(o_ref.dtype)                     # lane-dense store
    return kernel


def _make_streamed_kernel(th, n_h, inv_dim, eps, cdt):
    """Fused forward, grid=(rows, layers, hidden tiles); y carried in VMEM."""
    def kernel(x_ref, wi_ref, bi_ref, g_ref, w13_ref, w2t_ref, o_ref,
               y_ref, nx_ref, *maybe_acc):
        l = pl.program_id(1)
        h = pl.program_id(2)
        n_l = pl.num_programs(1)

        @pl.when(jnp.logical_and(l == 0, h == 0))
        def _():
            # in_layer once per row tile
            y0 = jnp.dot(x_ref[...], wi_ref[...],
                         preferred_element_type=jnp.float32)
            y_ref[...] = y0 + bi_ref[...].astype(jnp.float32)

        @pl.when(h == 0)
        def _():
            # RMSNorm once per (row tile, layer), cached for all hidden tiles
            yf = y_ref[...]
            ms = jnp.sum(yf * yf, axis=-1, keepdims=True) * inv_dim
            nx_ref[...] = ((yf * jax.lax.rsqrt(ms + eps)).astype(cdt)
                           * g_ref[...].astype(cdt))

        hh = jnp.dot(nx_ref[...], w13_ref[...],
                     preferred_element_type=jnp.float32)
        h1 = hh[:, :th]
        h3 = hh[:, th:]
        gate = (h1 * jax.nn.sigmoid(h1)) * h3
        part = jnp.dot(gate.astype(cdt), w2t_ref[...],
                       preferred_element_type=jnp.float32)

        if n_h == 1:
            y_ref[...] += part                  # single hidden tile: no accumulator
        else:
            acc_ref = maybe_acc[0]

            @pl.when(h == 0)
            def _():
                acc_ref[...] = part             # init by assignment, no zero-fill

            @pl.when(h > 0)
            def _():
                acc_ref[...] += part

            @pl.when(h == n_h - 1)
            def _():
                y_ref[...] += acc_ref[...]      # residual

        @pl.when(jnp.logical_and(l == n_l - 1, h == n_h - 1))
        def _():
            o_ref[...] = y_ref[...].astype(o_ref.dtype)

    return kernel


# ------------------------------ pallas_call wrappers ------------------------
def _forward_resident(x2, params, *, tm, budget, est):
    mp, in_dim = x2.shape
    n_layers, n_h = params["n_layers"], params["n_h"]
    nlh, dim_p, two_th = params["w13"].shape
    th = two_th // 2
    kernel = _make_resident_kernel(n_layers, n_h, th, 1.0 / params["dim"],
                                   params["eps"], params["w13"].dtype)
    return pl.pallas_call(
        kernel,
        out_shape=jax.ShapeDtypeStruct((mp, dim_p), x2.dtype),
        grid_spec=pltpu.PrefetchScalarGridSpec(
            num_scalar_prefetch=0,
            grid=(mp // tm,),
            in_specs=[
                pl.BlockSpec((tm, in_dim), lambda i: (i, 0)),            # x rows
                pl.BlockSpec((in_dim, dim_p), lambda i: (0, 0)),         # W_in^T
                pl.BlockSpec((1, dim_p), lambda i: (0, 0)),              # bias
                pl.BlockSpec((n_layers, 1, dim_p), lambda i: (0, 0, 0)),  # gammas
                pl.BlockSpec((nlh, dim_p, two_th), lambda i: (0, 0, 0)),  # w1|w3 (resident)
                pl.BlockSpec((nlh, th, dim_p), lambda i: (0, 0, 0)),      # w2^T  (resident)
            ],
            out_specs=pl.BlockSpec((tm, dim_p), lambda i: (i, 0)),
        ),
        compiler_params=_compiler_params(("parallel",), est, budget),
    )(x2, params["in_w_t"], params["in_b"], params["gammas"],
      params["w13"], params["w2t"])


def _forward_streamed(x2, params, *, tm, budget, est):
    mp, in_dim = x2.shape
    n_layers, n_h = params["n_layers"], params["n_h"]
    _, dim_p, two_th = params["w13"].shape
    th = two_th // 2
    cdt = params["w13"].dtype
    kernel = _make_streamed_kernel(th, n_h, 1.0 / params["dim"],
                                   params["eps"], cdt)
    scratch = [pltpu.VMEM((tm, dim_p), jnp.float32),   # residual stream y
               pltpu.VMEM((tm, dim_p), cdt)]           # cached RMSNorm(y) * gamma
    if n_h > 1:
        scratch.append(pltpu.VMEM((tm, dim_p), jnp.float32))  # FFN accumulator
    # NOTE: pipeline_mode=pl.Buffered(3) on the two weight specs is a possible
    # further tweak when the hidden axis is long; left at the default here.
    return pl.pallas_call(
        kernel,
        out_shape=jax.ShapeDtypeStruct((mp, dim_p), x2.dtype),
        grid_spec=pltpu.PrefetchScalarGridSpec(
            num_scalar_prefetch=0,
            grid=(mp // tm, n_layers, n_h),
            in_specs=[
                pl.BlockSpec((tm, in_dim), lambda i, l, h: (i, 0)),
                pl.BlockSpec((in_dim, dim_p), lambda i, l, h: (0, 0)),
                pl.BlockSpec((1, dim_p), lambda i, l, h: (0, 0)),
                pl.BlockSpec((None, 1, dim_p), lambda i, l, h: (l, 0, 0)),
                pl.BlockSpec((None, dim_p, two_th),
                             lambda i, l, h: (l * n_h + h, 0, 0)),
                pl.BlockSpec((None, th, dim_p),
                             lambda i, l, h: (l * n_h + h, 0, 0)),
            ],
            out_specs=pl.BlockSpec((tm, dim_p), lambda i, l, h: (i, 0)),
            scratch_shapes=scratch,
        ),
        compiler_params=_compiler_params(
            ("parallel", "arbitrary", "arbitrary"), est, budget),
    )(x2, params["in_w_t"], params["in_b"], params["gammas"],
      params["w13"], params["w2t"])


# ------------------------------- full forward -------------------------------
def tabular_encoder(x, params, *, force_streamed=False):
    """x: (..., in_dim) -> (..., dim). `params` from prepare_params()."""
    lead = x.shape[:-1]
    in_dim = x.shape[-1]
    m = int(math.prod(lead)) if lead else 1
    x2 = x.reshape(m, in_dim)

    n_layers, n_h = params["n_layers"], params["n_h"]
    _, dim_p, two_th = params["w13"].shape
    th = two_th // 2
    hp = n_h * th
    dim = params["dim"]

    x_item = jnp.dtype(x.dtype).itemsize
    w_item = jnp.dtype(params["w13"].dtype).itemsize

    vmem_cap = _vmem_capacity_bytes()
    small_vmem = vmem_cap <= (80 << 20)               # v7x-like (64 MiB)
    budget = max(vmem_cap - (12 << 20), 32 << 20)     # leave headroom

    pack = _sublane_pack(x.dtype)
    tm, mp = _pick_row_tiling(m, pack, small_vmem)

    def resident_est(tm_):
        w_bytes = (in_dim * dim_p + dim_p
                   + n_layers * (dim_p + 3 * hp * dim_p)) * w_item
        return (2 * w_bytes                                  # (double-buffered) weights
                + 2 * tm_ * (in_dim + dim_p) * x_item        # x / out blocks
                + 4 * tm_ * (dim_p + hp) * 4)                # live f32 temporaries

    def streamed_est(tm_):
        return (2 * 3 * th * dim_p * w_item                  # w13 + w2t tiles (x2 buf)
                + 2 * (in_dim * dim_p + 2 * dim_p) * w_item  # W_in^T, bias, gamma
                + 2 * tm_ * (in_dim + dim_p) * x_item        # x / out blocks
                + tm_ * dim_p * (8 + x_item)                 # y + acc + nx carries
                + 3 * tm_ * th * 4)                          # hh / gate temporaries

    use_resident = (not force_streamed) and resident_est(tm) <= budget
    if not use_resident:
        while streamed_est(tm) > budget and tm > 2 * pack:   # defensive shrink
            tm = max(pack, _round_up(tm // 2, pack))
        mp = _round_up(m, tm)
        if small_vmem and mp // tm < 2:
            mp = 2 * tm

    if mp != m:
        x2 = jnp.pad(x2, ((0, mp - m), (0, 0)))   # zero rows: silu(0)*0 = 0, no NaN

    if use_resident:
        y = _forward_resident(x2, params, tm=tm, budget=budget,
                              est=resident_est(tm))
    else:
        y = _forward_streamed(x2, params, tm=tm, budget=budget,
                              est=streamed_est(tm))

    return y[:m, :dim].reshape(lead + (dim,))


# ------------------------- parameters (PyTorch layout) -----------------------
def init_raw_params(key, in_dim, dim, n_layers, dtype=jnp.float32):
    """Raw params in PyTorch nn.Linear layout (out_features, in_features)."""
    keys = jax.random.split(key, 2 + 3 * n_layers)
    bi = 1.0 / math.sqrt(in_dim)
    raw = {
        "in_w": jax.random.uniform(keys[0], (dim, in_dim), dtype, -bi, bi),
        "in_b": jax.random.uniform(keys[1], (dim,), dtype, -bi, bi),
        "layers": [],
    }
    hidden = int(2 * dim / 3)
    b1 = 1.0 / math.sqrt(dim)
    b2 = 1.0 / math.sqrt(hidden)
    for l in range(n_layers):
        k1, k2, k3 = keys[2 + 3 * l: 5 + 3 * l]
        raw["layers"].append({
            "w1": jax.random.uniform(k1, (hidden, dim), dtype, -b1, b1),
            "w2": jax.random.uniform(k2, (dim, hidden), dtype, -b2, b2),
            "w3": jax.random.uniform(k3, (hidden, dim), dtype, -b1, b1),
            "gamma": jnp.ones((dim,), dtype),
        })
    return raw


def prepare_params(raw, *, th_target=512, eps=1e-5):
    """One-time packing: transpose, fuse w1|w3, zero-pad dim and hidden to
    lane-dense 128-multiples, split hidden into n_h tiles of width th, and
    stack all layers along a merged (layer*hidden_tile) leading axis."""
    in_w, in_b = raw["in_w"], raw["in_b"]
    dim, in_dim = in_w.shape
    dim_p = _round_up(dim, 128)
    pad_d = dim_p - dim

    n_layers = len(raw["layers"])
    hidden = raw["layers"][0]["w1"].shape[0]
    hp0 = _round_up(hidden, 128)
    n_h = max(1, _cdiv(hp0, th_target))
    th = _round_up(_cdiv(hp0, n_h), 128)
    hp = n_h * th
    pad_h = hp - hidden

    gammas, w13s, w2ts = [], [], []
    for lyr in raw["layers"]:
        w1, w2, w3, gamma = lyr["w1"], lyr["w2"], lyr["w3"], lyr["gamma"]
        gammas.append(jnp.pad(gamma.reshape(1, -1), ((0, 0), (0, pad_d))))
        w1t = jnp.pad(jnp.transpose(w1), ((0, pad_d), (0, pad_h)))   # (dim_p, hp)
        w3t = jnp.pad(jnp.transpose(w3), ((0, pad_d), (0, pad_h)))   # (dim_p, hp)
        w13 = jnp.concatenate(
            [w1t.reshape(dim_p, n_h, th), w3t.reshape(dim_p, n_h, th)], axis=-1)
        w13s.append(jnp.transpose(w13, (1, 0, 2)))                   # (n_h, dim_p, 2*th)
        w2t = jnp.pad(jnp.transpose(w2), ((0, pad_h), (0, pad_d)))   # (hp, dim_p)
        w2ts.append(w2t.reshape(n_h, th, dim_p))

    return {
        "in_w_t": jnp.pad(jnp.transpose(in_w), ((0, 0), (0, pad_d))),  # (in_dim, dim_p)
        "in_b": jnp.pad(in_b.reshape(1, -1), ((0, 0), (0, pad_d))),    # (1, dim_p)
        "gammas": jnp.stack(gammas),                                   # (n_layers, 1, dim_p)
        "w13": jnp.stack(w13s).reshape(n_layers * n_h, dim_p, 2 * th),
        "w2t": jnp.stack(w2ts).reshape(n_layers * n_h, th, dim_p),
        "n_layers": n_layers,
        "n_h": n_h,
        "dim": dim,
        "eps": eps,
    }


# -------------------------------- reference ---------------------------------
def _reference(x, raw, *, eps=1e-5):
    y = x @ raw["in_w"].T + raw["in_b"]
    for lyr in raw["layers"]:
        yf = y.astype(jnp.float32)
        ms = jnp.mean(yf * yf, axis=-1, keepdims=True)
        n = (yf * jax.lax.rsqrt(ms + eps)).astype(y.dtype) * lyr["gamma"]
        h1 = n @ lyr["w1"].T
        h3 = n @ lyr["w3"].T
        y = y + ((h1 * jax.nn.sigmoid(h1)) * h3) @ lyr["w2"].T
    return y


if __name__ == "__main__":
    key = jax.random.PRNGKey(0)
    kx, kp, kx2, kp2 = jax.random.split(key, 4)

    # Test 1: small config (resident-weights fused path), non-lane-aligned dim.
    batch, in_dim, dim, n_layers = 6, 16, 32, 2        # hidden = int(2*32/3) = 21
    x = jax.random.normal(kx, (batch, in_dim), dtype=jnp.float32)
    raw = init_raw_params(kp, in_dim, dim, n_layers)
    params = prepare_params(raw)
    out = jax.block_until_ready(tabular_encoder(x, params))
    ref = _reference(x, raw)
    assert out.shape == (batch, dim)
    err = float(jnp.max(jnp.abs(out - ref)))
    assert jnp.allclose(out, ref, atol=2e-3, rtol=2e-3), err

    # Test 2: exercise the streamed fallback path (padded dim, 2 hidden tiles).
    batch2, in_dim2, dim2, n_layers2 = 10, 8, 320, 2   # hidden = 213 -> hp = 256
    x2 = jax.random.normal(kx2, (batch2, in_dim2), dtype=jnp.float32)
    raw2 = init_raw_params(kp2, in_dim2, dim2, n_layers2)
    params2 = prepare_params(raw2, th_target=128)
    out2 = jax.block_until_ready(
        tabular_encoder(x2, params2, force_streamed=True))
    ref2 = _reference(x2, raw2)
    assert out2.shape == (batch2, dim2)
    err2 = float(jnp.max(jnp.abs(out2 - ref2)))
    assert jnp.allclose(out2, ref2, atol=2e-3, rtol=2e-3), err2

    print("KERNEL_OK")
</pallas_src>

<mosaic_0001>
module attributes {stable_mosaic.version = 11 : i64} {
  func.func @kernel(%arg0: i32, %arg1: memref<8x16xf32, #tpu.memory_space<vmem>>, %arg2: memref<16x128xf32, #tpu.memory_space<vmem>>, %arg3: memref<1x128xf32, #tpu.memory_space<vmem>>, %arg4: memref<2x1x128xf32, #tpu.memory_space<vmem>>, %arg5: memref<2x128x256xf32, #tpu.memory_space<vmem>>, %arg6: memref<2x128x128xf32, #tpu.memory_space<vmem>>, %arg7: memref<8x128xf32, #tpu.memory_space<vmem>>) attributes {dimension_semantics = [#tpu.dimension_semantics<parallel>], iteration_bounds = array<i64: 2>, scalar_prefetch = 0 : i64, scratch_operands = 0 : i64, tpu.core_type = #tpu.core_type<tc>, window_params = [{transform_indices = @transform_0, window_bounds = array<i64: 8, 16>}, {pipeline_mode = #tpu.pipeline_mode<synchronous>, transform_indices = @transform_1, window_bounds = array<i64: 16, 128>}, {pipeline_mode = #tpu.pipeline_mode<synchronous>, transform_indices = @transform_2, window_bounds = array<i64: 1, 128>}, {pipeline_mode = #tpu.pipeline_mode<synchronous>, transform_indices = @transform_3, window_bounds = array<i64: 2, 1, 128>}, {pipeline_mode = #tpu.pipeline_mode<synchronous>, transform_indices = @transform_4, window_bounds = array<i64: 2, 128, 256>}, {pipeline_mode = #tpu.pipeline_mode<synchronous>, transform_indices = @transform_5, window_bounds = array<i64: 2, 128, 128>}, {transform_indices = @transform_6, window_bounds = array<i64: 8, 128>}]} {
    %c0 = arith.constant 0 : index
    %c0_0 = arith.constant 0 : index
    %0 = vector.load %arg1[%c0, %c0_0] : memref<8x16xf32, #tpu.memory_space<vmem>>, vector<8x16xf32>
    %c0_1 = arith.constant 0 : index
    %c0_2 = arith.constant 0 : index
    %1 = vector.load %arg2[%c0_1, %c0_2] : memref<16x128xf32, #tpu.memory_space<vmem>>, vector<16x128xf32>
    %cst = arith.constant dense<0.000000e+00> : vector<8x128xf32>
    %2 = tpu.matmul %0, %1, %cst {dimension_numbers = #tpu.dot_dimension_numbers<[1], [0], [0], [1], [0, 0, 1, 1], [], []>} : vector<8x16xf32>, vector<16x128xf32>, vector<8x128xf32> -> vector<8x128xf32>
    %c0_3 = arith.constant 0 : index
    %c0_4 = arith.constant 0 : index
    %3 = vector.load %arg3[%c0_3, %c0_4] : memref<1x128xf32, #tpu.memory_space<vmem>>, vector<1x128xf32>
    %4 = vector.broadcast %3 : vector<1x128xf32> to vector<8x128xf32>
    %5 = arith.addf %2, %4 : vector<8x128xf32>
    %6 = arith.mulf %5, %5 : vector<8x128xf32>
    %cst_5 = arith.constant dense<0.000000e+00> : vector<8xf32>
    %7 = vector.multi_reduction <add>, %6, %cst_5 [1] : vector<8x128xf32> to vector<8xf32>
    %8 = vector.shape_cast %7 : vector<8xf32> to vector<8x1xf32>
    %cst_6 = arith.constant 3.125000e-02 : f32
    %9 = vector.broadcast %cst_6 : f32 to vector<8x1xf32>
    %10 = arith.mulf %8, %9 : vector<8x1xf32>
    %cst_7 = arith.constant 9.99999974E-6 : f32
    %11 = vector.broadcast %cst_7 : f32 to vector<8x1xf32>
    %12 = arith.addf %10, %11 : vector<8x1xf32>
    %13 = math.rsqrt %12 : vector<8x1xf32>
    %14 = vector.broadcast %13 : vector<8x1xf32> to vector<8x128xf32>
    %15 = arith.mulf %5, %14 : vector<8x128xf32>
    %c0_8 = arith.constant 0 : index
    %c0_9 = arith.constant 0 : index
    %c0_10 = arith.constant 0 : index
    %16 = vector.load %arg4[%c0_8, %c0_9, %c0_10] : memref<2x1x128xf32, #tpu.memory_space<vmem>>, vector<1x1x128xf32>
    %17 = vector.shape_cast %16 : vector<1x1x128xf32> to vector<1x128xf32>
    %18 = vector.broadcast %17 : vector<1x128xf32> to vector<8x128xf32>
    %19 = arith.mulf %15, %18 : vector<8x128xf32>
    %c0_11 = arith.constant 0 : index
    %c0_12 = arith.constant 0 : index
    %c0_13 = arith.constant 0 : index
    %20 = vector.load %arg5[%c0_11, %c0_12, %c0_13] : memref<2x128x256xf32, #tpu.memory_space<vmem>>, vector<1x128x256xf32>
    %21 = vector.shape_cast %20 : vector<1x128x256xf32> to vector<128x256xf32>
    %cst_14 = arith.constant dense<0.000000e+00> : vector<8x256xf32>
    %22 = tpu.matmul %19, %21, %cst_14 {dimension_numbers = #tpu.dot_dimension_numbers<[1], [0], [0], [1], [0, 0, 1, 1], [], []>} : vector<8x128xf32>, vector<128x256xf32>, vector<8x256xf32> -> vector<8x256xf32>
    %23 = vector.extract_strided_slice %22 {offsets = [0, 0], sizes = [8, 128], strides = [1, 1]} : vector<8x256xf32> to vector<8x128xf32>
    %24 = vector.extract_strided_slice %22 {offsets = [0, 128], sizes = [8, 128], strides = [1, 1]} : vector<8x256xf32> to vector<8x128xf32>
    %25 = arith.negf %23 : vector<8x128xf32>
    %26 = math.exp %25 : vector<8x128xf32>
    %cst_15 = arith.constant 1.000000e+00 : f32
    %27 = vector.broadcast %cst_15 : f32 to vector<8x128xf32>
    %28 = arith.addf %27, %26 : vector<8x128xf32>
    %29 = arith.divf %27, %28 : vector<8x128xf32>
    %30 = arith.mulf %23, %29 : vector<8x128xf32>
    %31 = arith.mulf %30, %24 : vector<8x128xf32>
    %c0_16 = arith.constant 0 : index
    %c0_17 = arith.constant 0 : index
    %c0_18 = arith.constant 0 : index
    %32 = vector.load %arg6[%c0_16, %c0_17, %c0_18] : memref<2x128x128xf32, #tpu.memory_space<vmem>>, vector<1x128x128xf32>
    %33 = vector.shape_cast %32 : vector<1x128x128xf32> to vector<128x128xf32>
    %cst_19 = arith.constant dense<0.000000e+00> : vector<8x128xf32>
    %34 = tpu.matmul %31, %33, %cst_19 {dimension_numbers = #tpu.dot_dimension_numbers<[1], [0], [0], [1], [0, 0, 1, 1], [], []>} : vector<8x128xf32>, vector<128x128xf32>, vector<8x128xf32> -> vector<8x128xf32>
    %35 = arith.addf %5, %34 : vector<8x128xf32>
    %36 = arith.mulf %35, %35 : vector<8x128xf32>
    %cst_20 = arith.constant dense<0.000000e+00> : vector<8xf32>
    %37 = vector.multi_reduction <add>, %36, %cst_20 [1] : vector<8x128xf32> to vector<8xf32>
    %38 = vector.shape_cast %37 : vector<8xf32> to vector<8x1xf32>
    %cst_21 = arith.constant 3.125000e-02 : f32
    %39 = vector.broadcast %cst_21 : f32 to vector<8x1xf32>
    %40 = arith.mulf %38, %39 : vector<8x1xf32>
    %cst_22 = arith.constant 9.99999974E-6 : f32
    %41 = vector.broadcast %cst_22 : f32 to vector<8x1xf32>
    %42 = arith.addf %40, %41 : vector<8x1xf32>
    %43 = math.rsqrt %42 : vector<8x1xf32>
    %44 = vector.broadcast %43 : vector<8x1xf32> to vector<8x128xf32>
    %45 = arith.mulf %35, %44 : vector<8x128xf32>
    %c1 = arith.constant 1 : index
    %c0_23 = arith.constant 0 : index
    %c0_24 = arith.constant 0 : index
    %46 = vector.load %arg4[%c1, %c0_23, %c0_24] : memref<2x1x128xf32, #tpu.memory_space<vmem>>, vector<1x1x128xf32>
    %47 = vector.shape_cast %46 : vector<1x1x128xf32> to vector<1x128xf32>
    %48 = vector.broadcast %47 : vector<1x128xf32> to vector<8x128xf32>
    %49 = arith.mulf %45, %48 : vector<8x128xf32>
    %c1_25 = arith.constant 1 : index
    %c0_26 = arith.constant 0 : index
    %c0_27 = arith.constant 0 : index
    %50 = vector.load %arg5[%c1_25, %c0_26, %c0_27] : memref<2x128x256xf32, #tpu.memory_space<vmem>>, vector<1x128x256xf32>
    %51 = vector.shape_cast %50 : vector<1x128x256xf32> to vector<128x256xf32>
    %cst_28 = arith.constant dense<0.000000e+00> : vector<8x256xf32>
    %52 = tpu.matmul %49, %51, %cst_28 {dimension_numbers = #tpu.dot_dimension_numbers<[1], [0], [0], [1], [0, 0, 1, 1], [], []>} : vector<8x128xf32>, vector<128x256xf32>, vector<8x256xf32> -> vector<8x256xf32>
    %53 = vector.extract_strided_slice %52 {offsets = [0, 0], sizes = [8, 128], strides = [1, 1]} : vector<8x256xf32> to vector<8x128xf32>
    %54 = vector.extract_strided_slice %52 {offsets = [0, 128], sizes = [8, 128], strides = [1, 1]} : vector<8x256xf32> to vector<8x128xf32>
    %55 = arith.negf %53 : vector<8x128xf32>
    %56 = math.exp %55 : vector<8x128xf32>
    %cst_29 = arith.constant 1.000000e+00 : f32
    %57 = vector.broadcast %cst_29 : f32 to vector<8x128xf32>
    %58 = arith.addf %57, %56 : vector<8x128xf32>
    %59 = arith.divf %57, %58 : vector<8x128xf32>
    %60 = arith.mulf %53, %59 : vector<8x128xf32>
    %61 = arith.mulf %60, %54 : vector<8x128xf32>
    %c1_30 = arith.constant 1 : index
    %c0_31 = arith.constant 0 : index
    %c0_32 = arith.constant 0 : index
    %62 = vector.load %arg6[%c1_30, %c0_31, %c0_32] : memref<2x128x128xf32, #tpu.memory_space<vmem>>, vector<1x128x128xf32>
    %63 = vector.shape_cast %62 : vector<1x128x128xf32> to vector<128x128xf32>
    %cst_33 = arith.constant dense<0.000000e+00> : vector<8x128xf32>
    %64 = tpu.matmul %61, %63, %cst_33 {dimension_numbers = #tpu.dot_dimension_numbers<[1], [0], [0], [1], [0, 0, 1, 1], [], []>} : vector<8x128xf32>, vector<128x128xf32>, vector<8x128xf32> -> vector<8x128xf32>
    %65 = arith.addf %35, %64 : vector<8x128xf32>
    %c0_34 = arith.constant 0 : index
    %c0_35 = arith.constant 0 : index
    %66 = vector.load %arg7[%c0_34, %c0_35] : memref<8x128xf32, #tpu.memory_space<vmem>>, vector<8x128xf32>
    tpu.vector_store %arg7[%c0_34, %c0_35], %65 {strides = array<i32>} : memref<8x128xf32, #tpu.memory_space<vmem>>, vector<8x128xf32>,
    return
  }
  func.func @transform_0(%arg0: i32) -> (i32, i32) {
    %c0_i32 = arith.constant 0 : i32
    %c0_i32_0 = arith.constant 0 : i32
    return %arg0, %c0_i32 : i32, i32
  }
  func.func @transform_1(%arg0: i32) -> (i32, i32) {
    %c0_i32 = arith.constant 0 : i32
    %c0_i32_0 = arith.constant 0 : i32
    %c0_i32_1 = arith.constant 0 : i32
    return %c0_i32, %c0_i32_0 : i32, i32
  }
  func.func @transform_2(%arg0: i32) -> (i32, i32) {
    %c0_i32 = arith.constant 0 : i32
    %c0_i32_0 = arith.constant 0 : i32
    %c0_i32_1 = arith.constant 0 : i32
    return %c0_i32, %c0_i32_0 : i32, i32
  }
  func.func @transform_3(%arg0: i32) -> (i32, i32, i32) {
    %c0_i32 = arith.constant 0 : i32
    %c0_i32_0 = arith.constant 0 : i32
    %c0_i32_1 = arith.constant 0 : i32
    %c0_i32_2 = arith.constant 0 : i32
    return %c0_i32, %c0_i32_0, %c0_i32_1 : i32, i32, i32
  }
  func.func @transform_4(%arg0: i32) -> (i32, i32, i32) {
    %c0_i32 = arith.constant 0 : i32
    %c0_i32_0 = arith.constant 0 : i32
    %c0_i32_1 = arith.constant 0 : i32
    %c0_i32_2 = arith.constant 0 : i32
    return %c0_i32, %c0_i32_0, %c0_i32_1 : i32, i32, i32
  }
  func.func @transform_5(%arg0: i32) -> (i32, i32, i32) {
    %c0_i32 = arith.constant 0 : i32
    %c0_i32_0 = arith.constant 0 : i32
    %c0_i32_1 = arith.constant 0 : i32
    %c0_i32_2 = arith.constant 0 : i32
    return %c0_i32, %c0_i32_0, %c0_i32_1 : i32, i32, i32
  }
  func.func @transform_6(%arg0: i32) -> (i32, i32) {
    %c0_i32 = arith.constant 0 : i32
    %c0_i32_0 = arith.constant 0 : i32
    return %arg0, %c0_i32 : i32, i32
  }
}

</mosaic_0001>

<llo_original>
// kernel: tpu_custom_call.1
$region0: #{tpu_custom_call.1}
  #allocation0 [shape = 'u32[]', space=smem, size = 0x4, offset = 0x4, fixed_abs, tag = 'smem constant byte address 0x4 - core index']
  #allocation1 [shape = 'u32[144,128]{1,0:T(1,128)}', space=vmem, size = 0x12000, scoped, tag = 'internal scratch']
  %s0 = inlined_call_operand.hbm [shape: f32[16,16], index: 0, kind: input, shape index: {}]
  %s1 = inlined_call_operand.hbm [shape: f32[16,128], index: 1, kind: input, shape index: {}]
  %s2 = inlined_call_operand.vmem [shape: f32[1,128], index: 2, kind: input, shape index: {}]
  %s3 = inlined_call_operand.vmem [shape: f32[2,1,128], index: 3, kind: input, shape index: {}]
  %s4 = inlined_call_operand.hbm [shape: f32[2,128,256], index: 4, kind: input, shape index: {}]
  %s5 = inlined_call_operand.hbm [shape: f32[2,128,128], index: 5, kind: input, shape index: {}]
  %s6 = inlined_call_operand.hbm [shape: f32[16,128], index: 6, kind: output, shape index: {}]
  %s7 = sld [smem:[#allocation0]]
  $region73: #{tpu_custom_call.1} parent=0
    _
  %s9 = ssub.s32 1, %s7
  %s10 = scalar_select 0, %s9, %s7
  $region1: #{tpu_custom_call.1} parent=0
    #allocation2 [shape = 'u8[8192]{0}', space=vmem, size = 0x2000, scoped, tag = 'input window, operand 0']
    #allocation3 [shape = 's32[2]{0}', space=sflag, size = 0x8, scoped, tag = 'scoped memory for tpu_custom_call.1']
    #allocation4 [shape = 's32[2]{0}', space=sflag, size = 0x8, scoped, tag = 'scoped memory for tpu_custom_call.1']
    #allocation5 [shape = 'u8[8192]{0}', space=vmem, size = 0x2000, scoped, tag = 'input window, operand 1, single buffered']
    #allocation6 [shape = 's32[1]{0}', space=sflag, size = 0x4, scoped, tag = 'scoped memory for tpu_custom_call.1']
    #allocation7 [shape = 'u8[262144]{0}', space=vmem, size = 0x40000, scoped, tag = 'input window, operand 4, single buffered']
    #allocation8 [shape = 'u8[131072]{0}', space=vmem, size = 0x20000, scoped, tag = 'input window, operand 5, single buffered']
    #allocation9 [shape = 's32[1]{0}', space=sflag, size = 0x4, scoped, tag = 'scoped memory for tpu_custom_call.1']
    #allocation10 [shape = 'u8[8192]{0}', space=vmem, size = 0x2000, scoped, tag = 'output window, operand 0']
    %11 = vsyncpa [#allocation3], 0
    %s12 = scalar_lea.sflag [#allocation3], 1
    %13 = vsyncpa %s12, 0
    %14 = vsyncpa [#allocation6], 0
    %15 = vsyncpa [#allocation9], 0
    %16 = vsyncpa [#allocation4], 0
    %s17 = scalar_lea.sflag [#allocation4], 1
    %18 = vsyncpa %s17, 0
    loop: start=0, step=1, limit=4
    $region2: #{tpu_custom_call.1} parent=1 // loop_pre_header
      _
    $region3: #{tpu_custom_call.1} parent=1 // loop_header
      %s20 = sphi 0, %s24
      %p21 = scmp.ge.s32.totalorder %s20, 4
      %s30 = sphi 0, %s32
      %s33 = sphi 0, %s30
      %s34 = sphi 0, %s33
      %s50 = sphi 0, %s34
      %s54 = sphi 0, %s54
      %s56 = sphi 0, %s54
      %s57 = sphi 0, %s56
      %s71 = sphi 0, %s57
      %s75 = sphi 0, %s75
      %s77 = sphi 0, %s75
      %s78 = sphi 0, %s77
      %s92 = sphi 0, %s78
      %s96 = sphi 0, %s96
      %s98 = sphi 0, %s96
      %s99 = sphi 0, %s98
      %s113 = sphi 0, %s99
      %s117 = sphi 0, %s117
      %s119 = sphi 0, %s117
      %s120 = sphi 0, %s119
      %s134 = sphi 0, %s120
      %s138 = sphi 0, %s138
      %s140 = sphi 0, %s138
      %s141 = sphi 0, %s140
      %s155 = sphi 0, %s141
      %s161 = sphi 0, %s163
      %s164 = sphi 0, %s161
      %s165 = sphi 0, %s164
      %s181 = sphi 0, %s165
    $region4: #{tpu_custom_call.1} parent=1 // loop_header_branch
      %23 = sbr.rel (%p21) target = $region8
    $region5: #{tpu_custom_call.1} parent=1 // loop_body
      %s25 = ssub.s32 %s20, 1
      %s26 = ssub.s32 %s20, 2
      %s27 = sadd.s32 %s20, 1
      %s28 = ssub.s32 %s20, %s27
      %p29 = scmp.eq.s32.totalorder %s28, 0
      %s31 = sadd.s32 %s30, 1
      %s32 = scalar_select %p29, %s30, %s31
      %p35 = pneg %p29
      %p36 = scmp.eq.s32.totalorder %s20, 1
      %p37 = por %p35, %p36
      %p38 = scmp.ne.s32.totalorder %s30, %s33
      %p39 = scmp.eq.s32.totalorder %s20, 0
      %p40 = por %p38, %p39
      %p41 = scmp.ne.s32.totalorder %s30, %s33
      %p42 = scmp.eq.s32.totalorder %s25, 1
      %p43 = por %p41, %p42
      %p44 = scmp.ne.s32.totalorder %s33, %s34
      %p45 = scmp.eq.s32.totalorder %s25, 0
      %p46 = por %p44, %p45
      %p47 = scmp.ne.s32.totalorder %s33, %s34
      %p48 = scmp.eq.s32.totalorder %s26, 1
      %p49 = por %p47, %p48
      %p51 = scmp.ne.s32.totalorder %s34, %s50
      %p52 = scmp.eq.s32.totalorder %s26, 0
      %p53 = por %p51, %p52
      %s55 = sadd.s32 %s54, 1
      %p58 = scmp.eq.s32.totalorder %s20, 1
      %p59 = scmp.ne.s32.totalorder %s54, %s56
      %p60 = scmp.eq.s32.totalorder %s20, 0
      %p61 = por %p59, %p60
      %p62 = scmp.ne.s32.totalorder %s54, %s56
      %p63 = scmp.eq.s32.totalorder %s25, 1
      %p64 = por %p62, %p63
      %p65 = scmp.ne.s32.totalorder %s56, %s57
      %p66 = scmp.eq.s32.totalorder %s25, 0
      %p67 = por %p65, %p66
      %p68 = scmp.ne.s32.totalorder %s56, %s57
      %p69 = scmp.eq.s32.totalorder %s26, 1
      %p70 = por %p68, %p69
      %p72 = scmp.ne.s32.totalorder %s57, %s71
      %p73 = scmp.eq.s32.totalorder %s26, 0
      %p74 = por %p72, %p73
      %s76 = sadd.s32 %s75, 1
      %p79 = scmp.eq.s32.totalorder %s20, 1
      %p80 = scmp.ne.s32.totalorder %s75, %s77
      %p81 = scmp.eq.s32.totalorder %s20, 0
      %p82 = por %p80, %p81
      %p83 = scmp.ne.s32.totalorder %s75, %s77
      %p84 = scmp.eq.s32.totalorder %s25, 1
      %p85 = por %p83, %p84
      %p86 = scmp.ne.s32.totalorder %s77, %s78
      %p87 = scmp.eq.s32.totalorder %s25, 0
      %p88 = por %p86, %p87
      %p89 = scmp.ne.s32.totalorder %s77, %s78
      %p90 = scmp.eq.s32.totalorder %s26, 1
      %p91 = por %p89, %p90
      %p93 = scmp.ne.s32.totalorder %s78, %s92
      %p94 = scmp.eq.s32.totalorder %s26, 0
      %p95 = por %p93, %p94
      %s97 = sadd.s32 %s96, 1
      %p100 = scmp.eq.s32.totalorder %s20, 1
      %p101 = scmp.ne.s32.totalorder %s96, %s98
      %p102 = scmp.eq.s32.totalorder %s20, 0
      %p103 = por %p101, %p102
      %p104 = scmp.ne.s32.totalorder %s96, %s98
      %p105 = scmp.eq.s32.totalorder %s25, 1
      %p106 = por %p104, %p105
      %p107 = scmp.ne.s32.totalorder %s98, %s99
      %p108 = scmp.eq.s32.totalorder %s25, 0
      %p109 = por %p107, %p108
      %p110 = scmp.ne.s32.totalorder %s98, %s99
      %p111 = scmp.eq.s32.totalorder %s26, 1
      %p112 = por %p110, %p111
      %p114 = scmp.ne.s32.totalorder %s99, %s113
      %p115 = scmp.eq.s32.totalorder %s26, 0
      %p116 = por %p114, %p115
      %s118 = sadd.s32 %s117, 1
      %p121 = scmp.eq.s32.totalorder %s20, 1
      %p122 = scmp.ne.s32.totalorder %s117, %s119
      %p123 = scmp.eq.s32.totalorder %s20, 0
      %p124 = por %p122, %p123
      %p125 = scmp.ne.s32.totalorder %s117, %s119
      %p126 = scmp.eq.s32.totalorder %s25, 1
      %p127 = por %p125, %p126
      %p128 = scmp.ne.s32.totalorder %s119, %s120
      %p129 = scmp.eq.s32.totalorder %s25, 0
      %p130 = por %p128, %p129
      %p131 = scmp.ne.s32.totalorder %s119, %s120
      %p132 = scmp.eq.s32.totalorder %s26, 1
      %p133 = por %p131, %p132
      %p135 = scmp.ne.s32.totalorder %s120, %s134
      %p136 = scmp.eq.s32.totalorder %s26, 0
      %p137 = por %p135, %p136
      %s139 = sadd.s32 %s138, 1
      %p142 = scmp.eq.s32.totalorder %s20, 1
      %p143 = scmp.ne.s32.totalorder %s138, %s140
      %p144 = scmp.eq.s32.totalorder %s20, 0
      %p145 = por %p143, %p144
      %p146 = scmp.ne.s32.totalorder %s138, %s140
      %p147 = scmp.eq.s32.totalorder %s25, 1
      %p148 = por %p146, %p147
      %p149 = scmp.ne.s32.totalorder %s140, %s141
      %p150 = scmp.eq.s32.totalorder %s25, 0
      %p151 = por %p149, %p150
      %p152 = scmp.ne.s32.totalorder %s140, %s141
      %p153 = scmp.eq.s32.totalorder %s26, 1
      %p154 = por %p152, %p153
      %p156 = scmp.ne.s32.totalorder %s141, %s155
      %p157 = scmp.eq.s32.totalorder %s26, 0
      %p158 = por %p156, %p157
      %s159 = ssub.s32 %s20, %s27
      %p160 = scmp.eq.s32.totalorder %s159, 0
      %s162 = sadd.s32 %s161, 1
      %s163 = scalar_select %p160, %s161, %s162
      %p166 = pneg %p160
      %p167 = scmp.eq.s32.totalorder %s20, 1
      %p168 = por %p166, %p167
      %p169 = scmp.ne.s32.totalorder %s161, %s164
      %p170 = scmp.eq.s32.totalorder %s20, 0
      %p171 = por %p169, %p170
      %p172 = scmp.ne.s32.totalorder %s161, %s164
      %p173 = scmp.eq.s32.totalorder %s25, 1
      %p174 = por %p172, %p173
      %p175 = scmp.ne.s32.totalorder %s164, %s165
      %p176 = scmp.eq.s32.totalorder %s25, 0
      %p177 = por %p175, %p176
      %p178 = scmp.ne.s32.totalorder %s164, %s165
      %p179 = scmp.eq.s32.totalorder %s26, 1
      %p180 = por %p178, %p179
      %p182 = scmp.ne.s32.totalorder %s165, %s181
      %p183 = scmp.eq.s32.totalorder %s26, 0
      %p184 = por %p182, %p183
      %p185 = scmp.le.s32.totalorder 1, %s20
      %p186 = scmp.lt.s32.totalorder %s20, 3
      %p187 = pnand %p185, %p186
      %p188 = pneg %p187
      // Predicated region
      $region9: #{tpu_custom_call.1} parent=5 // pred_check
        _
      $region10: #{tpu_custom_call.1} parent=5 // pred_check_branch
        %190 = sbr.rel (%p187) target = $region12
      $region11: #{tpu_custom_call.1} parent=5 // pred_region
        %s191 = ssub.s32 %s20, 1
        // Predicated region
        $region13: #{tpu_custom_call.1} parent=11 // pred_check
          %p192 = pneg %p67
        $region14: #{tpu_custom_call.1} parent=11 // pred_check_branch
          %194 = sbr.rel (%p192) target = $region16
        $region15: #{tpu_custom_call.1} parent=11 // pred_region
          %s196 = ssub.s32 256, 256
          %197 = vsyncadd [#allocation6], %s196
          %s198 = sshll.u32 [#allocation5], 4
          %s199 = int_to_ptr.vmem [resolvable:$true] %s198
          %204 = dma.hbm_to_vmem [thread:$0]  %s1, 256, %s199, [#allocation6], 128, 128, 8
        $region16: #{tpu_custom_call.1} parent=11 // pred_fallthru
          _
        // Predicated region
        $region17: #{tpu_custom_call.1} parent=11 // pred_check
          %p205 = pneg %p88
        $region18: #{tpu_custom_call.1} parent=11 // pred_check_branch
          %207 = sbr.rel (%p205) target = $region20
        $region19: #{tpu_custom_call.1} parent=11 // pred_region
          _
        $region20: #{tpu_custom_call.1} parent=11 // pred_fallthru
          _
        // Predicated region
        $region21: #{tpu_custom_call.1} parent=11 // pred_check
          %p208 = pneg %p109
        $region22: #{tpu_custom_call.1} parent=11 // pred_check_branch
          %210 = sbr.rel (%p208) target = $region24
        $region23: #{tpu_custom_call.1} parent=11 // pred_region
          _
        $region24: #{tpu_custom_call.1} parent=11 // pred_fallthru
          _
        // Predicated region
        $region25: #{tpu_custom_call.1} parent=11 // pred_check
          %p211 = pneg %p130
        $region26: #{tpu_custom_call.1} parent=11 // pred_check_branch
          %213 = sbr.rel (%p211) target = $region28
        $region27: #{tpu_custom_call.1} parent=11 // pred_region
          %s215 = ssub.s32 8192, 8192
          %216 = vsyncadd [#allocation6], %s215
          %s217 = sshll.u32 [#allocation7], 4
          %s218 = int_to_ptr.vmem [resolvable:$true] %s217
          %223 = dma.hbm_to_vmem [thread:$0]  %s4, 8192, %s218, [#allocation6], 256, 256, 16
        $region28: #{tpu_custom_call.1} parent=11 // pred_fallthru
          _
        // Predicated region
        $region29: #{tpu_custom_call.1} parent=11 // pred_check
          %p224 = pneg %p151
        $region30: #{tpu_custom_call.1} parent=11 // pred_check_branch
          %226 = sbr.rel (%p224) target = $region32
        $region31: #{tpu_custom_call.1} parent=11 // pred_region
          %s228 = ssub.s32 4096, 4096
          %229 = vsyncadd [#allocation9], %s228
          %s230 = sshll.u32 [#allocation8], 4
          %s231 = int_to_ptr.vmem [resolvable:$true] %s230
          %236 = dma.hbm_to_vmem [thread:$0]  %s5, 4096, %s231, [#allocation9], 128, 128, 8
        $region32: #{tpu_custom_call.1} parent=11 // pred_fallthru
          _
      $region12: #{tpu_custom_call.1} parent=5 // pred_fallthru
        _
      %p237 = scmp.lt.s32.totalorder %s20, 2
      // Predicated region
      $region33: #{tpu_custom_call.1} parent=5 // pred_check
        %p238 = pneg %p237
      $region34: #{tpu_custom_call.1} parent=5 // pred_check_branch
        %240 = sbr.rel (%p238) target = $region36
      $region35: #{tpu_custom_call.1} parent=5 // pred_region
        // Predicated region
        $region37: #{tpu_custom_call.1} parent=35 // pred_check
          %p241 = pneg %p40
        $region38: #{tpu_custom_call.1} parent=35 // pred_check_branch
          %243 = sbr.rel (%p241) target = $region40
        $region39: #{tpu_custom_call.1} parent=35 // pred_region
          %s244 = sand.u32 %s30, 1
          %s245 = scalar_lea.sflag [#allocation3], %s244
          %s246 = sand.u32 %s30, 1
          %s247 = smul.addr %s246, 8
          %s248 = scalar_lea.vmem [#allocation2], %s247
          %s250 = ssub.s32 128, 128
          %251 = vsyncadd %s245, %s250
          %s252 = smul.addr %s20, 128
          %s253 = scalar_lea.hbm %s0, %s252
          %s255 = sshll.u32 %s248, 4
          %s256 = int_to_ptr.vmem [resolvable:$true] %s255
          %258 = dma.hbm_to_vmem [thread:$0]  %s253, 128, %s256, %s245
        $region40: #{tpu_custom_call.1} parent=35 // pred_fallthru
          _
      $region36: #{tpu_custom_call.1} parent=5 // pred_fallthru
        _
      %p259 = scmp.le.s32.totalorder 1, %s20
      %p260 = scmp.lt.s32.totalorder %s20, 3
      %p261 = pnand %p259, %p260
      %p262 = pneg %p261
      // Predicated region
      $region41: #{tpu_custom_call.1} parent=5 // pred_check
        _
      $region42: #{tpu_custom_call.1} parent=5 // pred_check_branch
        %264 = sbr.rel (%p261) target = $region44
      $region43: #{tpu_custom_call.1} parent=5 // pred_region
        %s265 = ssub.s32 %s20, 1
        %s266 = sand.u32 %s33, 1
        %s267 = scalar_lea.sflag [#allocation3], %s266
        %s268 = sand.u32 %s33, 1
        %s269 = smul.addr %s268, 8
        %s270 = scalar_lea.vmem [#allocation2], %s269
        // Predicated region
        $region45: #{tpu_custom_call.1} parent=43 // pred_check
          %p271 = pneg %p46
        $region46: #{tpu_custom_call.1} parent=43 // pred_check_branch
          %273 = sbr.rel (%p271) target = $region48
        $region47: #{tpu_custom_call.1} parent=43 // pred_region
          %274 = dma.done %s267, 128
        $region48: #{tpu_custom_call.1} parent=43 // pred_fallthru
          _
        // Predicated region
        $region49: #{tpu_custom_call.1} parent=43 // pred_check
          %p275 = pneg %p67
        $region50: #{tpu_custom_call.1} parent=43 // pred_check_branch
          %277 = sbr.rel (%p275) target = $region52
        $region51: #{tpu_custom_call.1} parent=43 // pred_region
          %278 = dma.done [#allocation6], 256
        $region52: #{tpu_custom_call.1} parent=43 // pred_fallthru
          _
        // Predicated region
        $region53: #{tpu_custom_call.1} parent=43 // pred_check
          %p279 = pneg %p130
        $region54: #{tpu_custom_call.1} parent=43 // pred_check_branch
          %281 = sbr.rel (%p279) target = $region56
        $region55: #{tpu_custom_call.1} parent=43 // pred_region
          %282 = dma.done [#allocation6], 8192
        $region56: #{tpu_custom_call.1} parent=43 // pred_fallthru
          _
        // Predicated region
        $region57: #{tpu_custom_call.1} parent=43 // pred_check
          %p283 = pneg %p151
        $region58: #{tpu_custom_call.1} parent=43 // pred_check_branch
          %285 = sbr.rel (%p283) target = $region60
        $region59: #{tpu_custom_call.1} parent=43 // pred_region
          %286 = dma.done [#allocation9], 4096
        $region60: #{tpu_custom_call.1} parent=43 // pred_fallthru
          _
        %s287 = sand.u32 %s33, 1
        %s288 = scalar_lea.sflag [#allocation3], %s287
        %s289 = sand.u32 %s33, 1
        %s290 = smul.addr %s289, 8
        %s291 = scalar_lea.vmem [#allocation2], %s290
        %p292 = pneg %p46
        %p293 = pneg %p43
        %p294 = pneg %p67
        %p295 = pneg %p64
        %p296 = pneg %p88
        %p297 = pneg %p85
        %p298 = pneg %p109
        %p299 = pneg %p106
        %p300 = pneg %p130
        %p301 = pneg %p127
        %p302 = pneg %p151
        %p303 = pneg %p148
        %p304 = pneg %p177
        %p305 = pneg %p174
        %s306 = sand.u32 %s164, 1
        %s307 = scalar_lea.sflag [#allocation4], %s306
        %s308 = sand.u32 %s164, 1
        %s309 = smul.addr %s308, 8
        %s310 = scalar_lea.vmem [#allocation10], %s309
        %v311 = vld [vmem:[%s270] sm:$0xff]
        %v312 = vld [vmem:[#allocation5] sm:$0xff]
        %v313 = vld [vmem:[#allocation5 + $0x8] sm:$0xff]
        %v314 = vld [vmem:[%s2] sm:$0x1]
        %v316 = vlaneseq
        %v317 = vshrl.u32 %v316, 7
        %v318 = vsub.s32 0, %v317
        %v319 = vrot.slane %v314, %v318
        %vm321 = vcmask 130048
        %v323 = vsel %vm321, %v311, 0
        %325 = vmatprep.subr.mxu0 0.0
        %326 = vmatpush1.msra.mxu0 0.0
        %327 = vmatprep.subr.mxu0 0.0
        %328 = vmatpush1.msra.mxu0 0.0
        %329 = vmatprep.subr.mxu0 0.0
        %330 = vmatpush1.msra.mxu0 0.0
        %331 = vmatprep.subr.mxu0 0.0
        %332 = vmatpush1.msra.mxu0 0.0
        %333 = vmatprep.subr.mxu0 0.0
        %334 = vmatpush1.msra.mxu0 0.0
        %335 = vmatprep.subr.mxu0 0.0
        %336 = vmatpush1.msra.mxu0 0.0
        %337 = vmatprep.subr.mxu0 0.0
        %338 = vmatpush1.msra.mxu0 0.0
        %339 = vmatprep.subr.mxu0 0.0
        %340 = vmatpush1.msra.mxu0 0.0
        %341 = vmatprep.subr.mxu0 0.0
        %342 = vmatpush1.msra.mxu0 0.0
        %343 = vmatprep.subr.mxu0 0.0
        %344 = vmatpush1.msra.mxu0 0.0
        %345 = vmatprep.subr.mxu0 0.0
        %346 = vmatpush1.msra.mxu0 0.0
        %347 = vmatprep.subr.mxu0 0.0
        %348 = vmatpush1.msra.mxu0 0.0
        %349 = vmatprep.subr.mxu0 0.0
        %350 = vmatpush1.msra.mxu0 0.0
        %351 = vmatprep.subr.mxu0 0.0
        %352 = vmatpush1.msra.mxu0 0.0
        %353 = vmatprep.subr.mxu0 0.0
        %354 = vmatpush1.msra.mxu0 %v313
        %355 = vmatprep.subr.mxu0 0.0
        %356 = vmatpush1.msra.mxu0 %v312
        %357 = vmatprep.subr.mxu0 0.0
        %358 = vmatpush2.msra.mxu0 0.0
        %359 = vmatprep.subr.mxu0 0.0
        %360 = vmatpush2.msra.mxu0 0.0
        %361 = vmatprep.subr.mxu0 0.0
        %362 = vmatpush2.msra.mxu0 0.0
        %363 = vmatprep.subr.mxu0 0.0
        %364 = vmatpush2.msra.mxu0 0.0
        %365 = vmatprep.subr.mxu0 0.0
        %366 = vmatpush2.msra.mxu0 0.0
        %367 = vmatprep.subr.mxu0 0.0
        %368 = vmatpush2.msra.mxu0 0.0
        %369 = vmatprep.subr.mxu0 0.0
        %370 = vmatpush2.msra.mxu0 0.0
        %371 = vmatprep.subr.mxu0 0.0
        %372 = vmatpush2.msra.mxu0 0.0
        %373 = vmatprep.subr.mxu0 0.0
        %374 = vmatpush2.msra.mxu0 0.0
        %375 = vmatprep.subr.mxu0 0.0
        %376 = vmatpush2.msra.mxu0 0.0
        %377 = vmatprep.subr.mxu0 0.0
        %378 = vmatpush2.msra.mxu0 0.0
        %379 = vmatprep.subr.mxu0 0.0
        %380 = vmatpush2.msra.mxu0 0.0
        %381 = vmatprep.subr.mxu0 0.0
        %382 = vmatpush2.msra.mxu0 0.0
        %383 = vmatprep.subr.mxu0 0.0
        %384 = vmatpush2.msra.mxu0 0.0
        %385 = vmatprep.subr.mxu0 0.0
        %386 = vmatpush2.msra.mxu0 0.0
        %387 = vmatprep.subr.mxu0 0.0
        %388 = vmatpush2.msra.mxu0 0.0
        %389 = vmatprep.mubr.f32.mxu0 0.0
        %390 = vmatmul.mubr.f32.gmra.mxu0 %v323
        %v391 = vpop.f32.mrf.mxu0
        %v392 = vadd.f32 %v319, %v391
        %v393 = vpop.f32.mrf.mxu0
        %394 = vdwg.mxu0
        %v395 = vmul.f32 %v392, %v392
        %396 = vadd.xlane.f32.xlu0 %v395
        %v397 = vpop.xlane.xlu0 %396
        %v398 = vmul.f32 %v397, 0.03125
        %v399 = vadd.f32 %v398, 1e-05
        %v400 = vrsqrt.pop %v399
        %v401 = vmul.f32 %v392, %v400
        %v402 = vld [vmem:[%s3] sm:$0x1]
        %v404 = vlaneseq
        %v405 = vshrl.u32 %v404, 7
        %v406 = vsub.s32 0, %v405
        %v407 = vrot.slane %v402, %v406
        %v409 = vmul.f32 %v401, %v407
        %v410 = vld [vmem:[#allocation7] sm:$0xff]
        %v411 = vld [vmem:[#allocation7 + $0x8] sm:$0xff]
        %v412 = vld [vmem:[#allocation7 + $0x10] sm:$0xff]
        %v413 = vld [vmem:[#allocation7 + $0x18] sm:$0xff]
        %v414 = vld [vmem:[#allocation7 + $0x20] sm:$0xff]
        %v415 = vld [vmem:[#allocation7 + $0x28] sm:$0xff]
        %v416 = vld [vmem:[#allocation7 + $0x30] sm:$0xff]
        %v417 = vld [vmem:[#allocation7 + $0x38] sm:$0xff]
        %v418 = vld [vmem:[#allocation7 + $0x40] sm:$0xff]
        %v419 = vld [vmem:[#allocation7 + $0x48] sm:$0xff]
        %v420 = vld [vmem:[#allocation7 + $0x50] sm:$0xff]
        %v421 = vld [vmem:[#allocation7 + $0x58] sm:$0xff]
        %v422 = vld [vmem:[#allocation7 + $0x60] sm:$0xff]
        %v423 = vld [vmem:[#allocation7 + $0x68] sm:$0xff]
        %v424 = vld [vmem:[#allocation7 + $0x70] sm:$0xff]
        %v425 = vld [vmem:[#allocation7 + $0x78] sm:$0xff]
        %v426 = vld [vmem:[#allocation7 + $0x80] sm:$0xff]
        %v427 = vld [vmem:[#allocation7 + $0x88] sm:$0xff]
        %v428 = vld [vmem:[#allocation7 + $0x90] sm:$0xff]
        %v429 = vld [vmem:[#allocation7 + $0x98] sm:$0xff]
        %v430 = vld [vmem:[#allocation7 + $0xa0] sm:$0xff]
        %v431 = vld [vmem:[#allocation7 + $0xa8] sm:$0xff]
        %v432 = vld [vmem:[#allocation7 + $0xb0] sm:$0xff]
        %v433 = vld [vmem:[#allocation7 + $0xb8] sm:$0xff]
        %v434 = vld [vmem:[#allocation7 + $0xc0] sm:$0xff]
        %v435 = vld [vmem:[#allocation7 + $0xc8] sm:$0xff]
        %v436 = vld [vmem:[#allocation7 + $0xd0] sm:$0xff]
        %v437 = vld [vmem:[#allocation7 + $0xd8] sm:$0xff]
        %v438 = vld [vmem:[#allocation7 + $0xe0] sm:$0xff]
        %v439 = vld [vmem:[#allocation7 + $0xe8] sm:$0xff]
        %v440 = vld [vmem:[#allocation7 + $0xf0] sm:$0xff]
        %v441 = vld [vmem:[#allocation7 + $0xf8] sm:$0xff]
        %442 = vmatprep.subr.mxu0 %v441
        %443 = vmatpush1.msra.mxu0 %v440
        %444 = vmatprep.subr.mxu0 %v439
        %445 = vmatpush1.msra.mxu0 %v438
        %446 = vmatprep.subr.mxu0 %v437
        %447 = vmatpush1.msra.mxu0 %v436
        %448 = vmatprep.subr.mxu0 %v435
        %449 = vmatpush1.msra.mxu0 %v434
        %450 = vmatprep.subr.mxu0 %v433
        %451 = vmatpush1.msra.mxu0 %v432
        %452 = vmatprep.subr.mxu0 %v431
        %453 = vmatpush1.msra.mxu0 %v430
        %454 = vmatprep.subr.mxu0 %v429
        %455 = vmatpush1.msra.mxu0 %v428
        %456 = vmatprep.subr.mxu0 %v427
        %457 = vmatpush1.msra.mxu0 %v426
        %458 = vmatprep.subr.mxu0 %v425
        %459 = vmatpush1.msra.mxu0 %v424
        %460 = vmatprep.subr.mxu0 %v423
        %461 = vmatpush1.msra.mxu0 %v422
        %462 = vmatprep.subr.mxu0 %v421
        %463 = vmatpush1.msra.mxu0 %v420
        %464 = vmatprep.subr.mxu0 %v419
        %465 = vmatpush1.msra.mxu0 %v418
        %466 = vmatprep.subr.mxu0 %v417
        %467 = vmatpush1.msra.mxu0 %v416
        %468 = vmatprep.subr.mxu0 %v415
        %469 = vmatpush1.msra.mxu0 %v414
        %470 = vmatprep.subr.mxu0 %v413
        %471 = vmatpush1.msra.mxu0 %v412
        %472 = vmatprep.subr.mxu0 %v411
        %473 = vmatpush1.msra.mxu0 %v410
        %474 = vmatprep.subr.mxu0 0.0
        %475 = vmatpush2.msra.mxu0 0.0
        %476 = vmatprep.subr.mxu0 0.0
        %477 = vmatpush2.msra.mxu0 0.0
        %478 = vmatprep.subr.mxu0 0.0
        %479 = vmatpush2.msra.mxu0 0.0
        %480 = vmatprep.subr.mxu0 0.0
        %481 = vmatpush2.msra.mxu0 0.0
        %482 = vmatprep.subr.mxu0 0.0
        %483 = vmatpush2.msra.mxu0 0.0
        %484 = vmatprep.subr.mxu0 0.0
        %485 = vmatpush2.msra.mxu0 0.0
        %486 = vmatprep.subr.mxu0 0.0
        %487 = vmatpush2.msra.mxu0 0.0
        %488 = vmatprep.subr.mxu0 0.0
        %489 = vmatpush2.msra.mxu0 0.0
        %490 = vmatprep.subr.mxu0 0.0
        %491 = vmatpush2.msra.mxu0 0.0
        %492 = vmatprep.subr.mxu0 0.0
        %493 = vmatpush2.msra.mxu0 0.0
        %494 = vmatprep.subr.mxu0 0.0
        %495 = vmatpush2.msra.mxu0 0.0
        %496 = vmatprep.subr.mxu0 0.0
        %497 = vmatpush2.msra.mxu0 0.0
        %498 = vmatprep.subr.mxu0 0.0
        %499 = vmatpush2.msra.mxu0 0.0
        %500 = vmatprep.subr.mxu0 0.0
        %501 = vmatpush2.msra.mxu0 0.0
        %502 = vmatprep.subr.mxu0 0.0
        %503 = vmatpush2.msra.mxu0 0.0
        %504 = vmatprep.subr.mxu0 0.0
        %505 = vmatpush2.msra.mxu0 0.0
        %506 = vmatprep.mubr.f32.mxu0 0.0
        %507 = vmatmul.mubr.f32.gmra.mxu0 %v409
        %v508 = vpop.f32.mrf.mxu0
        %v509 = vadd.f32 0.0, %v508
        %v510 = vpop.f32.mrf.mxu0
        %v511 = vadd.f32 0.0, %v510
        %512 = vdwg.mxu0
        %v513 = vxor.u32 %v509, 2147483648
        %v514 = vmul.f32 %v513, 1.442695
        %v515 = vpow.pop %v514
        %v516 = vadd.f32 %v515, 1.0
        %v517 = vrcp.pop %v516
        %v518 = vmul.f32 1.0, %v517
        %v519 = vmul.f32 %v509, %v518
        %v520 = vmul.f32 %v519, %v511
        %v521 = vld [vmem:[#allocation8] sm:$0xff]
        %v522 = vld [vmem:[#allocation8 + $0x8] sm:$0xff]
        %v523 = vld [vmem:[#allocation8 + $0x10] sm:$0xff]
        %v524 = vld [vmem:[#allocation8 + $0x18] sm:$0xff]
        %v525 = vld [vmem:[#allocation8 + $0x20] sm:$0xff]
        %v526 = vld [vmem:[#allocation8 + $0x28] sm:$0xff]
        %v527 = vld [vmem:[#allocation8 + $0x30] sm:$0xff]
        %v528 = vld [vmem:[#allocation8 + $0x38] sm:$0xff]
        %v529 = vld [vmem:[#allocation8 + $0x40] sm:$0xff]
        %v530 = vld [vmem:[#allocation8 + $0x48] sm:$0xff]
        %v531 = vld [vmem:[#allocation8 + $0x50] sm:$0xff]
        %v532 = vld [vmem:[#allocation8 + $0x58] sm:$0xff]
        %v533 = vld [vmem:[#allocation8 + $0x60] sm:$0xff]
        %v534 = vld [vmem:[#allocation8 + $0x68] sm:$0xff]
        %v535 = vld [vmem:[#allocation8 + $0x70] sm:$0xff]
        %v536 = vld [vmem:[#allocation8 + $0x78] sm:$0xff]
        %537 = vmatprep.subr.mxu0 0.0
        %538 = vmatpush1.msra.mxu0 %v536
        %539 = vmatprep.subr.mxu0 0.0
        %540 = vmatpush1.msra.mxu0 %v535
        %541 = vmatprep.subr.mxu0 0.0
        %542 = vmatpush1.msra.mxu0 %v534
        %543 = vmatprep.subr.mxu0 0.0
        %544 = vmatpush1.msra.mxu0 %v533
        %545 = vmatprep.subr.mxu0 0.0
        %546 = vmatpush1.msra.mxu0 %v532
        %547 = vmatprep.subr.mxu0 0.0
        %548 = vmatpush1.msra.mxu0 %v531
        %549 = vmatprep.subr.mxu0 0.0
        %550 = vmatpush1.msra.mxu0 %v530
        %551 = vmatprep.subr.mxu0 0.0
        %552 = vmatpush1.msra.mxu0 %v529
        %553 = vmatprep.subr.mxu0 0.0
        %554 = vmatpush1.msra.mxu0 %v528
        %555 = vmatprep.subr.mxu0 0.0
        %556 = vmatpush1.msra.mxu0 %v527
        %557 = vmatprep.subr.mxu0 0.0
        %558 = vmatpush1.msra.mxu0 %v526
        %559 = vmatprep.subr.mxu0 0.0
        %560 = vmatpush1.msra.mxu0 %v525
        %561 = vmatprep.subr.mxu0 0.0
        %562 = vmatpush1.msra.mxu0 %v524
        %563 = vmatprep.subr.mxu0 0.0
        %564 = vmatpush1.msra.mxu0 %v523
        %565 = vmatprep.subr.mxu0 0.0
        %566 = vmatpush1.msra.mxu0 %v522
        %567 = vmatprep.subr.mxu0 0.0
        %568 = vmatpush1.msra.mxu0 %v521
        %569 = vmatprep.subr.mxu0 0.0
        %570 = vmatpush2.msra.mxu0 0.0
        %571 = vmatprep.subr.mxu0 0.0
        %572 = vmatpush2.msra.mxu0 0.0
        %573 = vmatprep.subr.mxu0 0.0
        %574 = vmatpush2.msra.mxu0 0.0
        %575 = vmatprep.subr.mxu0 0.0
        %576 = vmatpush2.msra.mxu0 0.0
        %577 = vmatprep.subr.mxu0 0.0
        %578 = vmatpush2.msra.mxu0 0.0
        %579 = vmatprep.subr.mxu0 0.0
        %580 = vmatpush2.msra.mxu0 0.0
        %581 = vmatprep.subr.mxu0 0.0
        %582 = vmatpush2.msra.mxu0 0.0
        %583 = vmatprep.subr.mxu0 0.0
        %584 = vmatpush2.msra.mxu0 0.0
        %585 = vmatprep.subr.mxu0 0.0
        %586 = vmatpush2.msra.mxu0 0.0
        %587 = vmatprep.subr.mxu0 0.0
        %588 = vmatpush2.msra.mxu0 0.0
        %589 = vmatprep.subr.mxu0 0.0
        %590 = vmatpush2.msra.mxu0 0.0
        %591 = vmatprep.subr.mxu0 0.0
        %592 = vmatpush2.msra.mxu0 0.0
        %593 = vmatprep.subr.mxu0 0.0
        %594 = vmatpush2.msra.mxu0 0.0
        %595 = vmatprep.subr.mxu0 0.0
        %596 = vmatpush2.msra.mxu0 0.0
        %597 = vmatprep.subr.mxu0 0.0
        %598 = vmatpush2.msra.mxu0 0.0
        %599 = vmatprep.subr.mxu0 0.0
        %600 = vmatpush2.msra.mxu0 0.0
        %601 = vmatprep.mubr.f32.mxu0 0.0
        %602 = vmatmul.mubr.f32.gmra.mxu0 %v520
        %v603 = vpop.f32.mrf.mxu0
        %v604 = vadd.f32 0.0, %v603
        %v605 = vpop.f32.mrf.mxu0
        %606 = vdwg.mxu0
        %v607 = vadd.f32 %v392, %v604
        %v608 = vmul.f32 %v607, %v607
        %609 = vadd.xlane.f32.xlu0 %v608
        %v610 = vpop.xlane.xlu0 %609
        %v611 = vmul.f32 %v610, 0.03125
        %v612 = vadd.f32 %v611, 1e-05
        %v613 = vrsqrt.pop %v612
        %v614 = vmul.f32 %v607, %v613
        %s615 = scalar_lea.vmem %s3, 1
        %v616 = vld [vmem:[%s615] sm:$0x1]
        %v618 = vlaneseq
        %v619 = vshrl.u32 %v618, 7
        %v620 = vsub.s32 0, %v619
        %v621 = vrot.slane %v616, %v620
        %v623 = vmul.f32 %v614, %v621
        %s624 = scalar_lea.vmem [#allocation7], 256
        %v625 = vld [vmem:[%s624] sm:$0xff]
        %v626 = vld [vmem:[%s624 + $0x8] sm:$0xff]
        %v627 = vld [vmem:[%s624 + $0x10] sm:$0xff]
        %v628 = vld [vmem:[%s624 + $0x18] sm:$0xff]
        %v629 = vld [vmem:[%s624 + $0x20] sm:$0xff]
        %v630 = vld [vmem:[%s624 + $0x28] sm:$0xff]
        %v631 = vld [vmem:[%s624 + $0x30] sm:$0xff]
        %v632 = vld [vmem:[%s624 + $0x38] sm:$0xff]
        %v633 = vld [vmem:[%s624 + $0x40] sm:$0xff]
        %v634 = vld [vmem:[%s624 + $0x48] sm:$0xff]
        %v635 = vld [vmem:[%s624 + $0x50] sm:$0xff]
        %v636 = vld [vmem:[%s624 + $0x58] sm:$0xff]
        %v637 = vld [vmem:[%s624 + $0x60] sm:$0xff]
        %v638 = vld [vmem:[%s624 + $0x68] sm:$0xff]
        %v639 = vld [vmem:[%s624 + $0x70] sm:$0xff]
        %v640 = vld [vmem:[%s624 + $0x78] sm:$0xff]
        %v641 = vld [vmem:[%s624 + $0x80] sm:$0xff]
        %v642 = vld [vmem:[%s624 + $0x88] sm:$0xff]
        %v643 = vld [vmem:[%s624 + $0x90] sm:$0xff]
        %v644 = vld [vmem:[%s624 + $0x98] sm:$0xff]
        %v645 = vld [vmem:[%s624 + $0xa0] sm:$0xff]
        %v646 = vld [vmem:[%s624 + $0xa8] sm:$0xff]
        %v647 = vld [vmem:[%s624 + $0xb0] sm:$0xff]
        %v648 = vld [vmem:[%s624 + $0xb8] sm:$0xff]
        %v649 = vld [vmem:[%s624 + $0xc0] sm:$0xff]
        %v650 = vld [vmem:[%s624 + $0xc8] sm:$0xff]
        %v651 = vld [vmem:[%s624 + $0xd0] sm:$0xff]
        %v652 = vld [vmem:[%s624 + $0xd8] sm:$0xff]
        %v653 = vld [vmem:[%s624 + $0xe0] sm:$0xff]
        %v654 = vld [vmem:[%s624 + $0xe8] sm:$0xff]
        %v655 = vld [vmem:[%s624 + $0xf0] sm:$0xff]
        %v656 = vld [vmem:[%s624 + $0xf8] sm:$0xff]
        %657 = vmatprep.subr.mxu0 %v656
        %658 = vmatpush1.msra.mxu0 %v655
        %659 = vmatprep.subr.mxu0 %v654
        %660 = vmatpush1.msra.mxu0 %v653
        %661 = vmatprep.subr.mxu0 %v652
        %662 = vmatpush1.msra.mxu0 %v651
        %663 = vmatprep.subr.mxu0 %v650
        %664 = vmatpush1.msra.mxu0 %v649
        %665 = vmatprep.subr.mxu0 %v648
        %666 = vmatpush1.msra.mxu0 %v647
        %667 = vmatprep.subr.mxu0 %v646
        %668 = vmatpush1.msra.mxu0 %v645
        %669 = vmatprep.subr.mxu0 %v644
        %670 = vmatpush1.msra.mxu0 %v643
        %671 = vmatprep.subr.mxu0 %v642
        %672 = vmatpush1.msra.mxu0 %v641
        %673 = vmatprep.subr.mxu0 %v640
        %674 = vmatpush1.msra.mxu0 %v639
        %675 = vmatprep.subr.mxu0 %v638
        %676 = vmatpush1.msra.mxu0 %v637
        %677 = vmatprep.subr.mxu0 %v636
        %678 = vmatpush1.msra.mxu0 %v635
        %679 = vmatprep.subr.mxu0 %v634
        %680 = vmatpush1.msra.mxu0 %v633
        %681 = vmatprep.subr.mxu0 %v632
        %682 = vmatpush1.msra.mxu0 %v631
        %683 = vmatprep.subr.mxu0 %v630
        %684 = vmatpush1.msra.mxu0 %v629
        %685 = vmatprep.subr.mxu0 %v628
        %686 = vmatpush1.msra.mxu0 %v627
        %687 = vmatprep.subr.mxu0 %v626
        %688 = vmatpush1.msra.mxu0 %v625
        %689 = vmatprep.subr.mxu0 0.0
        %690 = vmatpush2.msra.mxu0 0.0
        %691 = vmatprep.subr.mxu0 0.0
        %692 = vmatpush2.msra.mxu0 0.0
        %693 = vmatprep.subr.mxu0 0.0
        %694 = vmatpush2.msra.mxu0 0.0
        %695 = vmatprep.subr.mxu0 0.0
        %696 = vmatpush2.msra.mxu0 0.0
        %697 = vmatprep.subr.mxu0 0.0
        %698 = vmatpush2.msra.mxu0 0.0
        %699 = vmatprep.subr.mxu0 0.0
        %700 = vmatpush2.msra.mxu0 0.0
        %701 = vmatprep.subr.mxu0 0.0
        %702 = vmatpush2.msra.mxu0 0.0
        %703 = vmatprep.subr.mxu0 0.0
        %704 = vmatpush2.msra.mxu0 0.0
        %705 = vmatprep.subr.mxu0 0.0
        %706 = vmatpush2.msra.mxu0 0.0
        %707 = vmatprep.subr.mxu0 0.0
        %708 = vmatpush2.msra.mxu0 0.0
        %709 = vmatprep.subr.mxu0 0.0
        %710 = vmatpush2.msra.mxu0 0.0
        %711 = vmatprep.subr.mxu0 0.0
        %712 = vmatpush2.msra.mxu0 0.0
        %713 = vmatprep.subr.mxu0 0.0
        %714 = vmatpush2.msra.mxu0 0.0
        %715 = vmatprep.subr.mxu0 0.0
        %716 = vmatpush2.msra.mxu0 0.0
        %717 = vmatprep.subr.mxu0 0.0
        %718 = vmatpush2.msra.mxu0 0.0
        %719 = vmatprep.subr.mxu0 0.0
        %720 = vmatpush2.msra.mxu0 0.0
        %721 = vmatprep.mubr.f32.mxu0 0.0
        %722 = vmatmul.mubr.f32.gmra.mxu0 %v623
        %v723 = vpop.f32.mrf.mxu0
        %v724 = vadd.f32 0.0, %v723
        %v725 = vpop.f32.mrf.mxu0
        %v726 = vadd.f32 0.0, %v725
        %727 = vdwg.mxu0
        %v728 = vxor.u32 %v724, 2147483648
        %v729 = vmul.f32 %v728, 1.442695
        %v730 = vpow.pop %v729
        %v731 = vadd.f32 %v730, 1.0
        %v732 = vrcp.pop %v731
        %v733 = vmul.f32 1.0, %v732
        %v734 = vmul.f32 %v724, %v733
        %v735 = vmul.f32 %v734, %v726
        %s736 = scalar_lea.vmem [#allocation8], 128
        %v737 = vld [vmem:[%s736] sm:$0xff]
        %v738 = vld [vmem:[%s736 + $0x8] sm:$0xff]
        %v739 = vld [vmem:[%s736 + $0x10] sm:$0xff]
        %v740 = vld [vmem:[%s736 + $0x18] sm:$0xff]
        %v741 = vld [vmem:[%s736 + $0x20] sm:$0xff]
        %v742 = vld [vmem:[%s736 + $0x28] sm:$0xff]
        %v743 = vld [vmem:[%s736 + $0x30] sm:$0xff]
        %v744 = vld [vmem:[%s736 + $0x38] sm:$0xff]
        %v745 = vld [vmem:[%s736 + $0x40] sm:$0xff]
        %v746 = vld [vmem:[%s736 + $0x48] sm:$0xff]
        %v747 = vld [vmem:[%s736 + $0x50] sm:$0xff]
        %v748 = vld [vmem:[%s736 + $0x58] sm:$0xff]
        %v749 = vld [vmem:[%s736 + $0x60] sm:$0xff]
        %v750 = vld [vmem:[%s736 + $0x68] sm:$0xff]
        %v751 = vld [vmem:[%s736 + $0x70] sm:$0xff]
        %v752 = vld [vmem:[%s736 + $0x78] sm:$0xff]
        %753 = vmatprep.subr.mxu0 0.0
        %754 = vmatpush1.msra.mxu0 %v752
        %755 = vmatprep.subr.mxu0 0.0
        %756 = vmatpush1.msra.mxu0 %v751
        %757 = vmatprep.subr.mxu0 0.0
        %758 = vmatpush1.msra.mxu0 %v750
        %759 = vmatprep.subr.mxu0 0.0
        %760 = vmatpush1.msra.mxu0 %v749
        %761 = vmatprep.subr.mxu0 0.0
        %762 = vmatpush1.msra.mxu0 %v748
        %763 = vmatprep.subr.mxu0 0.0
        %764 = vmatpush1.msra.mxu0 %v747
        %765 = vmatprep.subr.mxu0 0.0
        %766 = vmatpush1.msra.mxu0 %v746
        %767 = vmatprep.subr.mxu0 0.0
        %768 = vmatpush1.msra.mxu0 %v745
        %769 = vmatprep.subr.mxu0 0.0
        %770 = vmatpush1.msra.mxu0 %v744
        %771 = vmatprep.subr.mxu0 0.0
        %772 = vmatpush1.msra.mxu0 %v743
        %773 = vmatprep.subr.mxu0 0.0
        %774 = vmatpush1.msra.mxu0 %v742
        %775 = vmatprep.subr.mxu0 0.0
        %776 = vmatpush1.msra.mxu0 %v741
        %777 = vmatprep.subr.mxu0 0.0
        %778 = vmatpush1.msra.mxu0 %v740
        %779 = vmatprep.subr.mxu0 0.0
        %780 = vmatpush1.msra.mxu0 %v739
        %781 = vmatprep.subr.mxu0 0.0
        %782 = vmatpush1.msra.mxu0 %v738
        %783 = vmatprep.subr.mxu0 0.0
        %784 = vmatpush1.msra.mxu0 %v737
        %785 = vmatprep.subr.mxu0 0.0
        %786 = vmatpush2.msra.mxu0 0.0
        %787 = vmatprep.subr.mxu0 0.0
        %788 = vmatpush2.msra.mxu0 0.0
        %789 = vmatprep.subr.mxu0 0.0
        %790 = vmatpush2.msra.mxu0 0.0
        %791 = vmatprep.subr.mxu0 0.0
        %792 = vmatpush2.msra.mxu0 0.0
        %793 = vmatprep.subr.mxu0 0.0
        %794 = vmatpush2.msra.mxu0 0.0
        %795 = vmatprep.subr.mxu0 0.0
        %796 = vmatpush2.msra.mxu0 0.0
        %797 = vmatprep.subr.mxu0 0.0
        %798 = vmatpush2.msra.mxu0 0.0
        %799 = vmatprep.subr.mxu0 0.0
        %800 = vmatpush2.msra.mxu0 0.0
        %801 = vmatprep.subr.mxu0 0.0
        %802 = vmatpush2.msra.mxu0 0.0
        %803 = vmatprep.subr.mxu0 0.0
        %804 = vmatpush2.msra.mxu0 0.0
        %805 = vmatprep.subr.mxu0 0.0
        %806 = vmatpush2.msra.mxu0 0.0
        %807 = vmatprep.subr.mxu0 0.0
        %808 = vmatpush2.msra.mxu0 0.0
        %809 = vmatprep.subr.mxu0 0.0
        %810 = vmatpush2.msra.mxu0 0.0
        %811 = vmatprep.subr.mxu0 0.0
        %812 = vmatpush2.msra.mxu0 0.0
        %813 = vmatprep.subr.mxu0 0.0
        %814 = vmatpush2.msra.mxu0 0.0
        %815 = vmatprep.subr.mxu0 0.0
        %816 = vmatpush2.msra.mxu0 0.0
        %817 = vmatprep.mubr.f32.mxu0 0.0
        %818 = vmatmul.mubr.f32.gmra.mxu0 %v735
        %v819 = vpop.f32.mrf.mxu0
        %v820 = vadd.f32 0.0, %v819
        %v821 = vpop.f32.mrf.mxu0
        %822 = vdwg.mxu0
        %v823 = vadd.f32 %v607, %v820
        %824 = vst [vmem:[%s310] sm:$0xff] %v823
        %s825 = sand.u32 %s164, 1
        %s826 = scalar_lea.sflag [#allocation4], %s825
        %s827 = sand.u32 %s164, 1
        %s828 = smul.addr %s827, 8
        %s829 = scalar_lea.vmem [#allocation10], %s828
        // Predicated region
        $region61: #{tpu_custom_call.1} parent=43 // pred_check
          %p830 = pneg %p174
        $region62: #{tpu_custom_call.1} parent=43 // pred_check_branch
          %832 = sbr.rel (%p830) target = $region64
        $region63: #{tpu_custom_call.1} parent=43 // pred_region
          %s834 = ssub.s32 128, 128
          %835 = vsyncadd %s826, %s834
          %s836 = smul.addr %s25, 128
          %s837 = scalar_lea.hbm %s6, %s836
          %s839 = sshll.u32 %s829, 4
          %s840 = int_to_ptr.vmem [resolvable:$true] %s839
          %842 = dma.vmem_to_hbm [thread:$0]  %s840, 128, %s837, %s826
        $region64: #{tpu_custom_call.1} parent=43 // pred_fallthru
          _
      $region44: #{tpu_custom_call.1} parent=5 // pred_fallthru
        _
      %p843 = scmp.le.s32.totalorder 2, %s20
      // Predicated region
      $region65: #{tpu_custom_call.1} parent=5 // pred_check
        %p844 = pneg %p843
      $region66: #{tpu_custom_call.1} parent=5 // pred_check_branch
        %846 = sbr.rel (%p844) target = $region68
      $region67: #{tpu_custom_call.1} parent=5 // pred_region
        %s847 = ssub.s32 %s20, 2
        // Predicated region
        $region69: #{tpu_custom_call.1} parent=67 // pred_check
          %p848 = pneg %p180
        $region70: #{tpu_custom_call.1} parent=67 // pred_check_branch
          %850 = sbr.rel (%p848) target = $region72
        $region71: #{tpu_custom_call.1} parent=67 // pred_region
          %s851 = sand.u32 %s165, 1
          %s852 = scalar_lea.sflag [#allocation4], %s851
          %s853 = sand.u32 %s165, 1
          %s854 = smul.addr %s853, 8
          %s855 = scalar_lea.vmem [#allocation10], %s854
          %856 = dma.done %s852, 128
        $region72: #{tpu_custom_call.1} parent=67 // pred_fallthru
          _
      $region68: #{tpu_custom_call.1} parent=5 // pred_fallthru
        _
    $region6: #{tpu_custom_call.1} parent=1 // loop_footer
      %s24 = sadd.s32 1, %s20
    $region7: #{tpu_custom_call.1} parent=1 // loop_footer_branch
      %19 = sbr.rel target = $region3
    $region8: #{tpu_custom_call.1} parent=1 // loop_exit
      _
    %857 = vsyncpa [#allocation3], 1
    %s858 = scalar_lea.sflag [#allocation3], 1
    %859 = vsyncpa %s858, 1
    %860 = vsyncpa [#allocation6], 1
    %861 = vsyncpa [#allocation9], 1
    %862 = vsyncpa [#allocation4], 1
    %s863 = scalar_lea.sflag [#allocation4], 1
    %864 = vsyncpa %s863, 1

</llo_original>
